<compile_context>
chip_gen: v6e
topology: v6e:2x2x1
jax: 0.10.0
libtpu: 0.0.40
codegen_flags: <defaults>
</compile_context>

<pallas_src>
import functools

import jax
import jax.numpy as jnp
from jax import lax
from jax.experimental import pallas as pl
from jax.experimental.pallas import tpu as pltpu

_LANES = 128
_X_BLOCK_BUDGET_BYTES = 4 << 20   # ~4 MiB per x block (review: 2-4 MiB beats 1 MiB)
_VMEM_HEADROOM_BYTES = 4 << 20
_VMEM_LIMIT_CAP_BYTES = 48 << 20  # stay safely under v7x's 64 MiB physical VMEM


def _round_up(a, b):
    return -(-a // b) * b


def _cdiv(a, b):
    return -(-a // b)


def _pixelnorm_kernel(x_ref, run_ref, y_ref, run_out_ref, *, eps, eaf, scale):
    # x_ref:   (N, TILE_S, 128)  input slab  (sublane = feature group, lane = feature)
    # run_ref: (1, TILE_S, 128)  running_magnitude slab
    x = x_ref[...].astype(jnp.float32)

    # Batch reduction along the leading (un-tiled) axis: N VPU adds per vreg.
    mean_sq = jnp.mean(x * x, axis=0, keepdims=True)             # (1, TILE_S, 128)
    msq_eps = mean_sq + eps

    # Normalize with one rsqrt per feature (EUP) + one vmul per element.
    inv_mag = lax.rsqrt(msq_eps)
    y_ref[...] = (x * inv_mag).astype(y_ref.dtype)

    # Exact sqrt for the running stat (extra EUP op per feature is free; avoids the small
    # (m+eps)*rsqrt(m+eps) precision drift over long training runs).
    magnitude = jnp.sqrt(msq_eps)
    run_old = run_ref[...].astype(jnp.float32)
    run_out_ref[...] = (scale * magnitude
                        + (1.0 - eaf) * run_old).astype(run_out_ref.dtype)


def _pick_tile_s(S, N, x_itemsize):
    """Choose the sublane tile for the feature-group axis."""
    # Packed-sublane granularity: 8 rows/vreg for 32-bit, 16 for bf16, 32 for 8-bit.
    pack = max(1, 4 // max(1, x_itemsize))
    mult = 8 * pack

    bytes_per_s_row = max(N, 1) * _LANES * x_itemsize
    target_s = max(mult, (_X_BLOCK_BUDGET_BYTES // bytes_per_s_row) // mult * mult)

    if target_s < S:
        return target_s                      # >= 2 grid steps automatically

    # Whole problem fits one block: still split into >=2 (ideally 4) tiles so the
    # "parallel" grid axis can shard across v7x's two TensorCores.
    if S >= 4 * mult:
        return _round_up(_cdiv(S, 4), mult)
    if S >= 2 * mult:
        return _round_up(_cdiv(S, 2), mult)
    return _round_up(S, mult)                # too small to split below sublane granularity


def pixel_norm(x_nchw, running_magnitude, *, eps=1e-5, momentum=0.1):
    """Training-mode PixelNorm forward. Returns (y, new_running_magnitude)."""
    N, C, H, W = x_nchw.shape
    F = C * H * W
    n = float(N * H * W)                     # input.numel() / input.size(1)
    if n <= 1.0:
        raise ValueError("PixelNorm training forward requires N*H*W > 1 (n/(n-1) factor).")
    eaf = float(momentum)                    # exponential_average_factor (training path)
    scale = eaf * n / (n - 1.0)

    x_itemsize = jnp.dtype(x_nchw.dtype).itemsize
    r_itemsize = jnp.dtype(running_magnitude.dtype).itemsize

    # Hot path: F a multiple of 128 -> pure reshapes, zero extra HBM traffic.
    f_al = _round_up(F, _LANES)
    S = f_al // _LANES

    x2d = x_nchw.reshape(N, F)
    run2d = running_magnitude.reshape(1, F)
    if f_al != F:
        # Fallback for lane-misaligned feature counts: one pad (read+write of x) outside
        # the kernel.  Padded lanes never affect real features (normalization is
        # per-feature) and are sliced off below.
        # TODO(synk): handle the ragged lane tail in-kernel (masked last block) to make
        # this path copy-free as well.
        x2d = jnp.pad(x2d, ((0, 0), (0, f_al - F)))
        run2d = jnp.pad(run2d, ((0, 0), (0, f_al - F)))
    x3d = x2d.reshape(N, S, _LANES)
    run3d = run2d.reshape(1, S, _LANES)

    tile_s = _pick_tile_s(S, N, x_itemsize)
    grid = (_cdiv(S, tile_s),)               # partial trailing block handled by Pallas masking

    # Explicit scoped-VMEM budget from the actual (double-buffered) block sizes.
    block_x = N * tile_s * _LANES * x_itemsize
    block_y = block_x
    block_r = tile_s * _LANES * r_itemsize
    total_db = 2 * (block_x + block_y + 2 * block_r)
    vmem_limit = min(max(total_db + _VMEM_HEADROOM_BYTES, 16 << 20), _VMEM_LIMIT_CAP_BYTES)

    kernel = functools.partial(_pixelnorm_kernel,
                               eps=float(eps), eaf=eaf, scale=scale)

    cost = pl.CostEstimate(
        flops=3 * N * f_al + 4 * f_al,
        transcendentals=2 * f_al,
        bytes_accessed=2 * N * f_al * x_itemsize + 2 * f_al * r_itemsize,
    )

    y3d, run_new3d = pl.pallas_call(
        kernel,
        out_shape=(
            jax.ShapeDtypeStruct((N, S, _LANES), x_nchw.dtype),
            jax.ShapeDtypeStruct((1, S, _LANES), running_magnitude.dtype),
        ),
        grid=grid,
        in_specs=[
            pl.BlockSpec((N, tile_s, _LANES), lambda j: (0, j, 0)),
            pl.BlockSpec((1, tile_s, _LANES), lambda j: (0, j, 0)),
        ],
        out_specs=(
            pl.BlockSpec((N, tile_s, _LANES), lambda j: (0, j, 0)),
            pl.BlockSpec((1, tile_s, _LANES), lambda j: (0, j, 0)),
        ),
        # Alias the running-magnitude slab in->out (avoids a separate output allocation;
        # the caller still receives a fresh functional array).
        input_output_aliases={1: 1},
        compiler_params=pltpu.CompilerParams(
            dimension_semantics=("parallel",),   # independent feature tiles (v7x: 2 TCs)
            vmem_limit_bytes=int(vmem_limit),
        ),
        cost_estimate=cost,
    )(x3d, run3d)

    if f_al != F:
        y = y3d.reshape(N, f_al)[:, :F].reshape(N, C, H, W)
        run_new = run_new3d.reshape(f_al)[:F].reshape(C, H, W)
    else:
        y = y3d.reshape(N, C, H, W)
        run_new = run_new3d.reshape(C, H, W)
    # TODO(synk): num_batches_tracked counter increment is host-side module bookkeeping,
    # not part of the kernel math (momentum is fixed, so eaf == momentum every step).
    return y, run_new


if __name__ == "__main__":
    key = jax.random.PRNGKey(0)
    N, C, H, W = 2, 4, 16, 16
    eps, momentum = 1e-5, 0.1

    x = jax.random.normal(key, (N, C, H, W), dtype=jnp.float32)
    # Buffer initialized as in __init__: torch.ones(feature_sizes[0], f[1], f[1]) = (C, H, W)
    running_magnitude = jnp.ones((C, H, W), dtype=jnp.float32)

    y, run_new = pixel_norm(x, running_magnitude, eps=eps, momentum=momentum)
    jax.block_until_ready((y, run_new))

    # Pure-JAX reference check.
    mag_ref = jnp.sqrt(jnp.mean(x * x, axis=0) + eps)
    n = float(N * H * W)
    y_ref = x / mag_ref[None]
    run_ref = momentum * mag_ref * n / (n - 1.0) + (1.0 - momentum) * running_magnitude
    assert jnp.allclose(y, y_ref, atol=1e-5, rtol=1e-5)
    assert jnp.allclose(run_new, run_ref, atol=1e-5, rtol=1e-5)

    print("KERNEL_OK")
</pallas_src>

<mosaic_0001>
module attributes {stable_mosaic.version = 11 : i64} {
  func.func @_pixelnorm_kernel(%arg0: i32, %arg1: memref<2x8x128xf32, #tpu.memory_space<vmem>>, %arg2: memref<1x8x128xf32, #tpu.memory_space<vmem>>, %arg3: memref<2x8x128xf32, #tpu.memory_space<vmem>>, %arg4: memref<1x8x128xf32, #tpu.memory_space<vmem>>) attributes {dimension_semantics = [#tpu.dimension_semantics<parallel>], iteration_bounds = array<i64: 1>, scalar_prefetch = 0 : i64, scratch_operands = 0 : i64, tpu.core_type = #tpu.core_type<tc>, window_params = [{transform_indices = @transform_0, window_bounds = array<i64: 2, 8, 128>}, {transform_indices = @transform_1, window_bounds = array<i64: 1, 8, 128>}, {transform_indices = @transform_2, window_bounds = array<i64: 2, 8, 128>}, {transform_indices = @transform_3, window_bounds = array<i64: 1, 8, 128>}]} {
    %c0 = arith.constant 0 : index
    %c0_0 = arith.constant 0 : index
    %c0_1 = arith.constant 0 : index
    %0 = vector.load %arg1[%c0, %c0_0, %c0_1] : memref<2x8x128xf32, #tpu.memory_space<vmem>>, vector<2x8x128xf32>
    %1 = arith.mulf %0, %0 : vector<2x8x128xf32>
    %cst = arith.constant dense<0.000000e+00> : vector<8x128xf32>
    %2 = vector.multi_reduction <add>, %1, %cst [0] : vector<2x8x128xf32> to vector<8x128xf32>
    %3 = vector.shape_cast %2 : vector<8x128xf32> to vector<1x8x128xf32>
    %cst_2 = arith.constant 2.000000e+00 : f32
    %4 = vector.broadcast %cst_2 : f32 to vector<1x8x128xf32>
    %5 = arith.divf %3, %4 : vector<1x8x128xf32>
    %cst_3 = arith.constant 9.99999974E-6 : f32
    %6 = vector.broadcast %cst_3 : f32 to vector<1x8x128xf32>
    %7 = arith.addf %5, %6 : vector<1x8x128xf32>
    %8 = math.rsqrt %7 : vector<1x8x128xf32>
    %9 = vector.broadcast %8 : vector<1x8x128xf32> to vector<2x8x128xf32>
    %10 = arith.mulf %0, %9 : vector<2x8x128xf32>
    %c0_4 = arith.constant 0 : index
    %c0_5 = arith.constant 0 : index
    %c0_6 = arith.constant 0 : index
    %11 = vector.load %arg3[%c0_4, %c0_5, %c0_6] : memref<2x8x128xf32, #tpu.memory_space<vmem>>, vector<2x8x128xf32>
    tpu.vector_store %arg3[%c0_4, %c0_5, %c0_6], %10 {strides = array<i32>} : memref<2x8x128xf32, #tpu.memory_space<vmem>>, vector<2x8x128xf32>,
    %12 = math.sqrt %7 : vector<1x8x128xf32>
    %c0_7 = arith.constant 0 : index
    %c0_8 = arith.constant 0 : index
    %c0_9 = arith.constant 0 : index
    %13 = vector.load %arg2[%c0_7, %c0_8, %c0_9] : memref<1x8x128xf32, #tpu.memory_space<vmem>>, vector<1x8x128xf32>
    %cst_10 = arith.constant 0.100195698 : f32
    %14 = vector.broadcast %cst_10 : f32 to vector<1x8x128xf32>
    %15 = arith.mulf %14, %12 : vector<1x8x128xf32>
    %cst_11 = arith.constant 0.899999976 : f32
    %16 = vector.broadcast %cst_11 : f32 to vector<1x8x128xf32>
    %17 = arith.mulf %16, %13 : vector<1x8x128xf32>
    %18 = arith.addf %15, %17 : vector<1x8x128xf32>
    %c0_12 = arith.constant 0 : index
    %c0_13 = arith.constant 0 : index
    %c0_14 = arith.constant 0 : index
    %19 = vector.load %arg4[%c0_12, %c0_13, %c0_14] : memref<1x8x128xf32, #tpu.memory_space<vmem>>, vector<1x8x128xf32>
    tpu.vector_store %arg4[%c0_12, %c0_13, %c0_14], %18 {strides = array<i32>} : memref<1x8x128xf32, #tpu.memory_space<vmem>>, vector<1x8x128xf32>,
    return
  }
  func.func @transform_0(%arg0: i32) -> (i32, i32, i32) {
    %c0_i32 = arith.constant 0 : i32
    %c0_i32_0 = arith.constant 0 : i32
    %c0_i32_1 = arith.constant 0 : i32
    return %c0_i32, %arg0, %c0_i32_0 : i32, i32, i32
  }
  func.func @transform_1(%arg0: i32) -> (i32, i32, i32) {
    %c0_i32 = arith.constant 0 : i32
    %c0_i32_0 = arith.constant 0 : i32
    %c0_i32_1 = arith.constant 0 : i32
    return %c0_i32, %arg0, %c0_i32_0 : i32, i32, i32
  }
  func.func @transform_2(%arg0: i32) -> (i32, i32, i32) {
    %c0_i32 = arith.constant 0 : i32
    %c0_i32_0 = arith.constant 0 : i32
    %c0_i32_1 = arith.constant 0 : i32
    return %c0_i32, %arg0, %c0_i32_0 : i32, i32, i32
  }
  func.func @transform_3(%arg0: i32) -> (i32, i32, i32) {
    %c0_i32 = arith.constant 0 : i32
    %c0_i32_0 = arith.constant 0 : i32
    %c0_i32_1 = arith.constant 0 : i32
    return %c0_i32, %arg0, %c0_i32_0 : i32, i32, i32
  }
}

</mosaic_0001>

<llo_original>
// kernel: tpu_custom_call.1
$region0: #{tpu_custom_call.1}
  #allocation0 [shape = 'u32[]', space=smem, size = 0x4, offset = 0x4, fixed_abs, tag = 'smem constant byte address 0x4 - core index']
  #allocation1 [shape = 'u32[144,128]{1,0:T(1,128)}', space=vmem, size = 0x12000, scoped, tag = 'internal scratch']
  %s0 = inlined_call_operand.vmem [shape: f32[2,8,128], index: 0, kind: input, shape index: {}]
  %s1 = inlined_call_operand.hbm [shape: f32[1,8,128], index: 1, kind: input, shape index: {}, may-alias: {1,3}]
  %s2 = inlined_call_operand.hbm [shape: f32[2,8,128], index: 2, kind: output, shape index: {0}]
  %s3 = inlined_call_operand.hbm [shape: f32[1,8,128], index: 3, kind: output, shape index: {1}, may-alias: {1,3}]
  %4 = xla_tuple %s2, %s3
  %s5 = sld [smem:[#allocation0]]
  $region30: #{tpu_custom_call.1} parent=0
    _
  %s7 = ssub.s32 1, %s5
  %s8 = scalar_select 0, %s7, %s5
  $region1: #{tpu_custom_call.1} parent=0
    #allocation2 [shape = 'u8[4096]{0}', space=vmem, size = 0x1000, scoped, tag = 'input window, operand 1, single buffered']
    #allocation3 [shape = 's32[1]{0}', space=sflag, size = 0x4, scoped, tag = 'scoped memory for tpu_custom_call.1']
    #allocation4 [shape = 's32[1]{0}', space=sflag, size = 0x4, scoped, tag = 'scoped memory for tpu_custom_call.1']
    #allocation5 [shape = 'u8[8192]{0}', space=vmem, size = 0x2000, scoped, tag = 'output window, operand 0, single buffered']
    #allocation6 [shape = 'u8[4096]{0}', space=vmem, size = 0x1000, scoped, tag = 'output window, operand 1, single buffered']
    #allocation7 [shape = 's32[1]{0}', space=sflag, size = 0x4, scoped, tag = 'scoped memory for tpu_custom_call.1']
    %9 = vsyncpa [#allocation3], 0
    %10 = vsyncpa [#allocation4], 0
    %11 = vsyncpa [#allocation7], 0
    // Predicated region
    $region2: #{tpu_custom_call.1} parent=1 // pred_check
      _
    $region3: #{tpu_custom_call.1} parent=1 // pred_check_branch
      %13 = sbr.rel (0) target = $region5
    $region4: #{tpu_custom_call.1} parent=1 // pred_region
      _
    $region5: #{tpu_custom_call.1} parent=1 // pred_fallthru
      _
    // Predicated region
    $region6: #{tpu_custom_call.1} parent=1 // pred_check
      _
    $region7: #{tpu_custom_call.1} parent=1 // pred_check_branch
      %15 = sbr.rel (0) target = $region9
    $region8: #{tpu_custom_call.1} parent=1 // pred_region
      %s17 = ssub.s32 128, 128
      %18 = vsyncadd [#allocation3], %s17
      %s20 = sshll.u32 [#allocation2], 4
      %s21 = int_to_ptr.vmem [resolvable:$true] %s20
      %23 = dma.hbm_to_vmem [thread:$0]  %s1, 128, %s21, [#allocation3]
    $region9: #{tpu_custom_call.1} parent=1 // pred_fallthru
      _
    // Predicated region
    $region10: #{tpu_custom_call.1} parent=1 // pred_check
      _
    $region11: #{tpu_custom_call.1} parent=1 // pred_check_branch
      %25 = sbr.rel (0) target = $region13
    $region12: #{tpu_custom_call.1} parent=1 // pred_region
      %26 = dma.done [#allocation3], 128
    $region13: #{tpu_custom_call.1} parent=1 // pred_fallthru
      _
    %v27 = vld [vmem:[%s0] sm:$0xff]
    %v28 = vld [vmem:[%s0 + $0x8] sm:$0xff]
    %v29 = vmul.f32 %v27, %v27
    %v30 = vmul.f32 %v28, %v28
    %v31 = vadd.f32 %v29, %v30
    %v32 = vrcp.pop 2.0
    %v33 = vmul.f32 %v31, %v32
    %v34 = vadd.f32 %v33, 1e-05
    %v35 = vrsqrt.pop %v34
    %v36 = vmul.f32 %v27, %v35
    %v37 = vmul.f32 %v28, %v35
    %38 = vst [vmem:[#allocation5] sm:$0xff] %v36
    %39 = vst [vmem:[#allocation5 + $0x8] sm:$0xff] %v37
    %v40 = vrsqrt.pop %v34
    %v41 = vmul.f32 %v34, %v40
    %vm42 = vcmp.eq.f32.partialorder %v34, inf
    %v43 = vsel %vm42, %v34, %v41
    %vm44 = vcmp.eq.f32.partialorder %v34, 0.0
    %v45 = vand.u32 %v34, 2147483648
    %v46 = vsel %vm44, %v45, %v43
    %v47 = vld [vmem:[#allocation2] sm:$0xff]
    %v48 = vmul.f32 %v46, 0.1001957
    %v49 = vmul.f32 %v47, 0.9
    %v50 = vadd.f32 %v48, %v49
    %51 = vst [vmem:[#allocation6] sm:$0xff] %v50
    // Predicated region
    $region14: #{tpu_custom_call.1} parent=1 // pred_check
      _
    $region15: #{tpu_custom_call.1} parent=1 // pred_check_branch
      %53 = sbr.rel (0) target = $region17
    $region16: #{tpu_custom_call.1} parent=1 // pred_region
      %s55 = ssub.s32 256, 256
      %56 = vsyncadd [#allocation4], %s55
      %s57 = sshll.u32 [#allocation5], 4
      %s58 = int_to_ptr.vmem [resolvable:$true] %s57
      %63 = dma.vmem_to_hbm [thread:$0]  %s58, 256, %s2, [#allocation4], 128, 128, 8
    $region17: #{tpu_custom_call.1} parent=1 // pred_fallthru
      _
    // Predicated region
    $region18: #{tpu_custom_call.1} parent=1 // pred_check
      _
    $region19: #{tpu_custom_call.1} parent=1 // pred_check_branch
      %65 = sbr.rel (0) target = $region21
    $region20: #{tpu_custom_call.1} parent=1 // pred_region
      %s67 = ssub.s32 128, 128
      %68 = vsyncadd [#allocation7], %s67
      %s70 = sshll.u32 [#allocation6], 4
      %s71 = int_to_ptr.vmem [resolvable:$true] %s70
      %73 = dma.vmem_to_hbm [thread:$0]  %s71, 128, %s3, [#allocation7]
    $region21: #{tpu_custom_call.1} parent=1 // pred_fallthru
      _
    // Predicated region
    $region22: #{tpu_custom_call.1} parent=1 // pred_check
      _
    $region23: #{tpu_custom_call.1} parent=1 // pred_check_branch
      %75 = sbr.rel (0) target = $region25
    $region24: #{tpu_custom_call.1} parent=1 // pred_region
      %76 = dma.done [#allocation4], 256
    $region25: #{tpu_custom_call.1} parent=1 // pred_fallthru
      _
    // Predicated region
    $region26: #{tpu_custom_call.1} parent=1 // pred_check
      _
    $region27: #{tpu_custom_call.1} parent=1 // pred_check_branch
      %78 = sbr.rel (0) target = $region29
    $region28: #{tpu_custom_call.1} parent=1 // pred_region
      %79 = dma.done [#allocation7], 128
    $region29: #{tpu_custom_call.1} parent=1 // pred_fallthru
      _
    %80 = vsyncpa [#allocation3], 1
    %81 = vsyncpa [#allocation4], 1
    %82 = vsyncpa [#allocation7], 1

</llo_original>
